<compile_context>
chip_gen: v7x
topology: tpu7x:2x2x1
jax: 0.10.0
libtpu: 0.0.40
codegen_flags: <defaults>
</compile_context>

<pallas_src>
import jax
import jax.numpy as jnp
from jax.experimental import pallas as pl
from jax.experimental.pallas import tpu as pltpu


def _round_up(n, m):
    return ((n + m - 1) // m) * m


def _discriminator_kernel(x_ref, w1_ref, b1_ref, w2_ref, b2_ref, w3_ref, b3_ref, o_ref):
    # fc1: bf16 MXU matmul, f32 accumulation; bias-add + ReLU in f32 on the VPU.
    xb = x_ref[...].astype(jnp.bfloat16)          # no-op if x is already bf16
    h1 = jnp.dot(xb, w1_ref[...], preferred_element_type=jnp.float32) + b1_ref[...]
    h1 = jnp.maximum(h1, 0.0)
    # TODO(synk): nn.Dropout train-mode (p=0.5) masking not implemented; eval-mode identity used.
    h2 = jnp.dot(h1.astype(jnp.bfloat16), w2_ref[...],
                 preferred_element_type=jnp.float32) + b2_ref[...]
    h2 = jnp.maximum(h2, 0.0)
    # fc3 has a single output unit: contract w3 (1, H) against h2 (tb, H) over H
    # (trans-B matmul, same pattern as q @ k.T) so the result lands directly as a
    # lane-dense (1, tb) row -- no 1-lane masked stores, no (tb,1)->(1,tb) relayout.
    logits = jax.lax.dot_general(
        w3_ref[...], h2.astype(jnp.bfloat16),
        dimension_numbers=(((1,), (1,)), ((), ())),
        preferred_element_type=jnp.float32)        # (1, tb)
    o_ref[...] = logits + b3_ref[0, 0]


def _pick_batch_tile(B, F, H, block_b):
    """Largest batch tile that (a) fits the VMEM budget, (b) keeps f32 intermediates
    small enough to avoid spills, (c) leaves >=~8 tiles for megacore load balance on
    large batches.  Returns (tb, vmem_limit_bytes)."""
    try:
        vmem_cap = pltpu.get_tpu_info().vmem_capacity_bytes   # 128 MiB v5e/v6e, 64 MiB v7x
    except Exception:
        vmem_cap = 128 * 2**20
    budget = int(0.75 * vmem_cap)                  # headroom for compiler/internal scratch

    resident = F * H * 2 + H * H * 2 + H * 2 + 2 * H * 4 + 4   # single-buffered weights/biases
    per_row = (2 * F * 4          # double-buffered streamed x tile (f32 worst case)
               + F * 2 + H * 2    # in-kernel bf16 copies of x / h1
               + 3 * H * 4        # h1/h2 f32 live values (+ slack)
               + 2 * 4)           # double-buffered (1, tb) output row
    tb_vmem = max(128, (budget - resident - (2 << 20)) // per_row)
    tb_live = max(128, (4 << 20) // (2 * H * 4))   # keep h1/h2 f32 <= ~4 MiB (spill guard)
    # Keep >= ~8 tiles for large batches (2 TCs on v7x + pipelining); small batches: 1 tile.
    tb_mega = _round_up(pl.cdiv(B, 8), 256) if B > 8 * 256 else _round_up(max(B, 1), 128)

    tb = min(block_b, tb_vmem, tb_live, tb_mega)
    tb = (tb // 256) * 256 if tb >= 256 else 128   # multiple of 256; 128 minimum
    return max(128, tb), budget


def discriminator_forward(x, w1, b1, w2, b2, w3, b3, *, block_b=4096):
    """Fused Discriminator forward (eval-mode): relu(fc1) -> relu(fc2) -> fc3.

    x: [B, input_size], f32 or bf16 (bf16 avoids the in-kernel cast and halves the
    dominant HBM stream).  Weights are stored transposed vs. torch.nn.Linear:
    w1: [input_size, H], w2: [H, H], w3: [H, 1]; biases [H] or [1, H] / [1, 1].
    Returns [B, 1] f32 logits.
    """
    B, F = x.shape
    H = w1.shape[1]

    # bf16 MXU operands (f32 accumulation in-kernel); fc3 weight as a (1, H) bf16 row
    # for the trans-B dot; biases f32; b3 as an SMEM scalar.
    w1b = w1.astype(jnp.bfloat16)
    w2b = w2.astype(jnp.bfloat16)
    w3r = w3.reshape(1, H).astype(jnp.bfloat16)
    b1f = b1.reshape(1, H).astype(jnp.float32)
    b2f = b2.reshape(1, H).astype(jnp.float32)
    b3r = b3.reshape(1, 1).astype(jnp.float32)

    tb, vmem_limit = _pick_batch_tile(B, F, H, block_b)
    Bp = _round_up(B, tb)
    if Bp != B:
        x = jnp.pad(x, ((0, Bp - B), (0, 0)))      # zero rows are harmless (sliced off)
    grid = (Bp // tb,)

    cost = pl.CostEstimate(
        flops=2 * Bp * (F * H + H * H + H),
        transcendentals=0,
        bytes_accessed=(Bp * F * x.dtype.itemsize + Bp * 4
                        + w1b.size * 2 + w2b.size * 2 + w3r.size * 2
                        + b1f.size * 4 + b2f.size * 4 + 4),
    )

    # VMEM-resident, single-buffered operands (constant index_map => fetched once).
    def _resident(a):
        return pl.BlockSpec(a.shape, lambda i: (0, 0), pipeline_mode=pl.Buffered(1))

    out = pl.pallas_call(
        _discriminator_kernel,
        out_shape=jax.ShapeDtypeStruct((1, Bp), jnp.float32),   # lane-dense logits row
        grid=grid,
        in_specs=[
            pl.BlockSpec((tb, F), lambda i: (i, 0)),            # x: streamed batch tiles
            _resident(w1b), _resident(b1f),                     # weights/biases resident
            _resident(w2b), _resident(b2f),
            _resident(w3r),
            pl.BlockSpec(memory_space=pltpu.MemorySpace.SMEM),  # b3 scalar in SMEM
        ],
        out_specs=pl.BlockSpec((1, tb), lambda i: (0, i)),
        compiler_params=pltpu.CompilerParams(
            dimension_semantics=("parallel",),                  # shard batch tiles across TCs
            vmem_limit_bytes=vmem_limit,
        ),
        cost_estimate=cost,
    )(x, w1b, b1f, w2b, b2f, w3r, b3r)
    return out[0, :B].reshape(B, 1)


def init_params(key, input_size, hidden_size):
    # Deterministic synthetic init (uniform, roughly matching torch Linear's scale).
    k1, k2, k3, k4, k5, k6 = jax.random.split(key, 6)
    s1 = 1.0 / jnp.sqrt(input_size)
    s2 = 1.0 / jnp.sqrt(hidden_size)
    w1 = jax.random.uniform(k1, (input_size, hidden_size), jnp.float32, -s1, s1)
    b1 = jax.random.uniform(k2, (1, hidden_size), jnp.float32, -s1, s1)
    w2 = jax.random.uniform(k3, (hidden_size, hidden_size), jnp.float32, -s2, s2)
    b2 = jax.random.uniform(k4, (1, hidden_size), jnp.float32, -s2, s2)
    w3 = jax.random.uniform(k5, (hidden_size, 1), jnp.float32, -s2, s2)
    b3 = jax.random.uniform(k6, (1, 1), jnp.float32, -s2, s2)
    return w1, b1, w2, b2, w3, b3


def reference_forward(x, w1, b1, w2, b2, w3, b3):
    # Mirrors the kernel's mixed precision: bf16 matmul operands, f32 accumulation/elementwise.
    h1 = jnp.maximum(
        jnp.dot(x.astype(jnp.bfloat16), w1.astype(jnp.bfloat16),
                preferred_element_type=jnp.float32) + b1.reshape(1, -1), 0.0)
    h2 = jnp.maximum(
        jnp.dot(h1.astype(jnp.bfloat16), w2.astype(jnp.bfloat16),
                preferred_element_type=jnp.float32) + b2.reshape(1, -1), 0.0)
    return jnp.dot(h2.astype(jnp.bfloat16), w3.astype(jnp.bfloat16),
                   preferred_element_type=jnp.float32) + b3.reshape(1, 1)


if __name__ == "__main__":
    input_size, hidden_size = 32, 32
    key = jax.random.PRNGKey(0)
    kx1, kx2, kp = jax.random.split(key, 3)
    params = init_params(kp, input_size, hidden_size)

    # Test 1: small ragged batch (single tile, rounded up to 128 internally).
    x1 = jax.random.normal(kx1, (12, input_size), jnp.float32)
    out1 = jax.block_until_ready(discriminator_forward(x1, *params))
    ref1 = reference_forward(x1, *params)
    assert out1.shape == (12, 1), out1.shape
    assert jnp.allclose(out1, ref1, atol=5e-3, rtol=5e-3), "mismatch vs reference (test 1)"

    # Test 2: multi-tile grid (exercises streamed x tiles + lane-dense output index_map).
    x2 = jax.random.normal(kx2, (260, input_size), jnp.float32)
    out2 = jax.block_until_ready(discriminator_forward(x2, *params, block_b=128))
    ref2 = reference_forward(x2, *params)
    assert out2.shape == (260, 1), out2.shape
    assert jnp.allclose(out2, ref2, atol=5e-3, rtol=5e-3), "mismatch vs reference (test 2)"

    print("KERNEL_OK")
</pallas_src>

<mosaic_0001>
module attributes {stable_mosaic.version = 11 : i64} {
  func.func @_discriminator_kernel(%arg0: i32, %arg1: memref<128x32xf32, #tpu.memory_space<vmem>>, %arg2: memref<32x32xbf16, #tpu.memory_space<vmem>>, %arg3: memref<1x32xf32, #tpu.memory_space<vmem>>, %arg4: memref<32x32xbf16, #tpu.memory_space<vmem>>, %arg5: memref<1x32xf32, #tpu.memory_space<vmem>>, %arg6: memref<1x32xbf16, #tpu.memory_space<vmem>>, %arg7: memref<1x1xf32, #tpu.memory_space<smem>>, %arg8: memref<1x128xf32, #tpu.memory_space<vmem>>) attributes {dimension_semantics = [#tpu.dimension_semantics<parallel>], iteration_bounds = array<i64: 1>, scalar_prefetch = 0 : i64, scratch_operands = 0 : i64, tpu.core_type = #tpu.core_type<tc>, window_params = [{transform_indices = @transform_0, window_bounds = array<i64: 128, 32>}, {pipeline_mode = #tpu.pipeline_mode<synchronous>, transform_indices = @transform_1, window_bounds = array<i64: 32, 32>}, {pipeline_mode = #tpu.pipeline_mode<synchronous>, transform_indices = @transform_2, window_bounds = array<i64: 1, 32>}, {pipeline_mode = #tpu.pipeline_mode<synchronous>, transform_indices = @transform_3, window_bounds = array<i64: 32, 32>}, {pipeline_mode = #tpu.pipeline_mode<synchronous>, transform_indices = @transform_4, window_bounds = array<i64: 1, 32>}, {pipeline_mode = #tpu.pipeline_mode<synchronous>, transform_indices = @transform_5, window_bounds = array<i64: 1, 32>}, {transform_indices = @transform_6, window_bounds = array<i64: 1, 1>}, {transform_indices = @transform_7, window_bounds = array<i64: 1, 128>}]} {
    %c0 = arith.constant 0 : index
    %c0_0 = arith.constant 0 : index
    %0 = vector.load %arg1[%c0, %c0_0] : memref<128x32xf32, #tpu.memory_space<vmem>>, vector<128x32xf32>
    %1 = arith.truncf %0 : vector<128x32xf32> to vector<128x32xbf16>
    %c0_1 = arith.constant 0 : index
    %c0_2 = arith.constant 0 : index
    %2 = vector.load %arg2[%c0_1, %c0_2] : memref<32x32xbf16, #tpu.memory_space<vmem>>, vector<32x32xbf16>
    %cst = arith.constant dense<0.000000e+00> : vector<128x32xf32>
    %3 = tpu.matmul %1, %2, %cst {dimension_numbers = #tpu.dot_dimension_numbers<[1], [0], [0], [1], [0, 0, 1, 1], [], []>} : vector<128x32xbf16>, vector<32x32xbf16>, vector<128x32xf32> -> vector<128x32xf32>
    %c0_3 = arith.constant 0 : index
    %c0_4 = arith.constant 0 : index
    %4 = vector.load %arg3[%c0_3, %c0_4] : memref<1x32xf32, #tpu.memory_space<vmem>>, vector<1x32xf32>
    %5 = vector.broadcast %4 : vector<1x32xf32> to vector<128x32xf32>
    %6 = arith.addf %3, %5 : vector<128x32xf32>
    %cst_5 = arith.constant 0.000000e+00 : f32
    %7 = vector.broadcast %cst_5 : f32 to vector<128x32xf32>
    %8 = arith.maximumf %6, %7 : vector<128x32xf32>
    %9 = arith.truncf %8 : vector<128x32xf32> to vector<128x32xbf16>
    %c0_6 = arith.constant 0 : index
    %c0_7 = arith.constant 0 : index
    %10 = vector.load %arg4[%c0_6, %c0_7] : memref<32x32xbf16, #tpu.memory_space<vmem>>, vector<32x32xbf16>
    %cst_8 = arith.constant dense<0.000000e+00> : vector<128x32xf32>
    %11 = tpu.matmul %9, %10, %cst_8 {dimension_numbers = #tpu.dot_dimension_numbers<[1], [0], [0], [1], [0, 0, 1, 1], [], []>} : vector<128x32xbf16>, vector<32x32xbf16>, vector<128x32xf32> -> vector<128x32xf32>
    %c0_9 = arith.constant 0 : index
    %c0_10 = arith.constant 0 : index
    %12 = vector.load %arg5[%c0_9, %c0_10] : memref<1x32xf32, #tpu.memory_space<vmem>>, vector<1x32xf32>
    %13 = vector.broadcast %12 : vector<1x32xf32> to vector<128x32xf32>
    %14 = arith.addf %11, %13 : vector<128x32xf32>
    %cst_11 = arith.constant 0.000000e+00 : f32
    %15 = vector.broadcast %cst_11 : f32 to vector<128x32xf32>
    %16 = arith.maximumf %14, %15 : vector<128x32xf32>
    %c0_12 = arith.constant 0 : index
    %c0_13 = arith.constant 0 : index
    %17 = vector.load %arg6[%c0_12, %c0_13] : memref<1x32xbf16, #tpu.memory_space<vmem>>, vector<1x32xbf16>
    %18 = arith.truncf %16 : vector<128x32xf32> to vector<128x32xbf16>
    %cst_14 = arith.constant dense<0.000000e+00> : vector<1x128xf32>
    %19 = tpu.matmul %17, %18, %cst_14 {dimension_numbers = #tpu.dot_dimension_numbers<[1], [1], [0], [0], [0, 0, 1, 0], [], []>} : vector<1x32xbf16>, vector<128x32xbf16>, vector<1x128xf32> -> vector<1x128xf32>
    %c0_15 = arith.constant 0 : index
    %c0_16 = arith.constant 0 : index
    %20 = memref.load %arg7[%c0_15, %c0_16] : memref<1x1xf32, #tpu.memory_space<smem>>
    %21 = vector.broadcast %20 : f32 to vector<1x128xf32>
    %22 = arith.addf %19, %21 : vector<1x128xf32>
    %c0_17 = arith.constant 0 : index
    %c0_18 = arith.constant 0 : index
    %23 = vector.load %arg8[%c0_17, %c0_18] : memref<1x128xf32, #tpu.memory_space<vmem>>, vector<1x128xf32>
    tpu.vector_store %arg8[%c0_17, %c0_18], %22 {strides = array<i32>} : memref<1x128xf32, #tpu.memory_space<vmem>>, vector<1x128xf32>,
    return
  }
  func.func @transform_0(%arg0: i32) -> (i32, i32) {
    %c0_i32 = arith.constant 0 : i32
    %c0_i32_0 = arith.constant 0 : i32
    return %arg0, %c0_i32 : i32, i32
  }
  func.func @transform_1(%arg0: i32) -> (i32, i32) {
    %c0_i32 = arith.constant 0 : i32
    %c0_i32_0 = arith.constant 0 : i32
    %c0_i32_1 = arith.constant 0 : i32
    return %c0_i32, %c0_i32_0 : i32, i32
  }
  func.func @transform_2(%arg0: i32) -> (i32, i32) {
    %c0_i32 = arith.constant 0 : i32
    %c0_i32_0 = arith.constant 0 : i32
    %c0_i32_1 = arith.constant 0 : i32
    return %c0_i32, %c0_i32_0 : i32, i32
  }
  func.func @transform_3(%arg0: i32) -> (i32, i32) {
    %c0_i32 = arith.constant 0 : i32
    %c0_i32_0 = arith.constant 0 : i32
    %c0_i32_1 = arith.constant 0 : i32
    return %c0_i32, %c0_i32_0 : i32, i32
  }
  func.func @transform_4(%arg0: i32) -> (i32, i32) {
    %c0_i32 = arith.constant 0 : i32
    %c0_i32_0 = arith.constant 0 : i32
    %c0_i32_1 = arith.constant 0 : i32
    return %c0_i32, %c0_i32_0 : i32, i32
  }
  func.func @transform_5(%arg0: i32) -> (i32, i32) {
    %c0_i32 = arith.constant 0 : i32
    %c0_i32_0 = arith.constant 0 : i32
    %c0_i32_1 = arith.constant 0 : i32
    return %c0_i32, %c0_i32_0 : i32, i32
  }
  func.func @transform_6(%arg0: i32) -> (i32, i32) {
    %c0_i32 = arith.constant 0 : i32
    %c0_i32_0 = arith.constant 0 : i32
    %c0_i32_1 = arith.constant 0 : i32
    return %c0_i32, %c0_i32_0 : i32, i32
  }
  func.func @transform_7(%arg0: i32) -> (i32, i32) {
    %c0_i32 = arith.constant 0 : i32
    %c0_i32_0 = arith.constant 0 : i32
    return %c0_i32, %arg0 : i32, i32
  }
}

</mosaic_0001>

<llo_original>
// kernel: tpu_custom_call.1
$region0: #{tpu_custom_call.1}
  #allocation0 [shape = 'u32[]', space=smem, size = 0x4, offset = 0x4, fixed_abs, tag = 'smem constant byte address 0x4 - core index']
  #allocation1 [shape = 'u32[144,128]{1,0:T(1,128)}', space=vmem, size = 0x12000, scoped, tag = 'internal scratch']
  #allocation2 [shape = 'f32[1,1]{1,0:T(1,128)S(6)}', space=smem, size = 0x200, scoped, tag = 'scoped memory for tpu_custom_call.1']
  %s0 = inlined_call_operand.hbm [shape: f32[128,32], index: 0, kind: input, shape index: {}]
  %s1 = inlined_call_operand.hbm [shape: bf16[32,32], index: 1, kind: input, shape index: {}]
  %s2 = inlined_call_operand.hbm [shape: f32[1,32], index: 2, kind: input, shape index: {}]
  %s3 = inlined_call_operand.hbm [shape: bf16[32,32], index: 3, kind: input, shape index: {}]
  %s4 = inlined_call_operand.hbm [shape: f32[1,32], index: 4, kind: input, shape index: {}]
  %s5 = inlined_call_operand.hbm [shape: bf16[1,32], index: 5, kind: input, shape index: {}]
  %s6 = inlined_call_operand.<no memory space> [shape: f32[1,1], index: 6, kind: input, shape index: {}]
  %s7 = inlined_call_operand.hbm [shape: f32[1,128], index: 7, kind: output, shape index: {}]
  %s8 = sld [smem:[#allocation0]]
  $region62: #{tpu_custom_call.1} parent=0
    _
  %s10 = ssub.s32 1, %s8
  %s11 = scalar_select 0, %s10, %s8
  %12 = sst [smem:[#allocation2]] %s6
  $region1: #{tpu_custom_call.1} parent=0
    #allocation3 [shape = 'u8[65536]{0}', space=vmem, size = 0x10000, scoped, tag = 'input window, operand 0, single buffered']
    #allocation4 [shape = 's32[1]{0}', space=sflag, size = 0x4, scoped, tag = 'scoped memory for tpu_custom_call.1']
    #allocation5 [shape = 's32[1]{0}', space=sflag, size = 0x4, scoped, tag = 'scoped memory for tpu_custom_call.1']
    #allocation6 [shape = 'u8[8192]{0}', space=vmem, size = 0x2000, scoped, tag = 'input window, operand 1, single buffered']
    #allocation7 [shape = 's32[1]{0}', space=sflag, size = 0x4, scoped, tag = 'scoped memory for tpu_custom_call.1']
    #allocation8 [shape = 'u8[512]{0}', space=vmem, size = 0x400, scoped, tag = 'input window, operand 2, single buffered']
    #allocation9 [shape = 'u8[8192]{0}', space=vmem, size = 0x2000, scoped, tag = 'input window, operand 3, single buffered']
    #allocation10 [shape = 's32[1]{0}', space=sflag, size = 0x4, scoped, tag = 'scoped memory for tpu_custom_call.1']
    #allocation11 [shape = 'u8[512]{0}', space=vmem, size = 0x400, scoped, tag = 'input window, operand 4, single buffered']
    #allocation12 [shape = 'u8[512]{0}', space=vmem, size = 0x400, scoped, tag = 'input window, operand 5, single buffered']
    #allocation13 [shape = 's32[1]{0}', space=sflag, size = 0x4, scoped, tag = 'scoped memory for tpu_custom_call.1']
    #allocation14 [shape = 'u8[512]{0}', space=vmem, size = 0x400, scoped, tag = 'output window, operand 0, single buffered']
    %13 = vsyncpa [#allocation4], 0
    %14 = vsyncpa [#allocation7], 0
    %15 = vsyncpa [#allocation10], 0
    %16 = vsyncpa [#allocation13], 0
    %17 = vsyncpa [#allocation5], 0
    // Predicated region
    $region2: #{tpu_custom_call.1} parent=1 // pred_check
      _
    $region3: #{tpu_custom_call.1} parent=1 // pred_check_branch
      %19 = sbr.rel (0) target = $region5
    $region4: #{tpu_custom_call.1} parent=1 // pred_region
      %s21 = ssub.s32 2048, 2048
      %22 = vsyncadd [#allocation4], %s21
      %s23 = sshll.u32 [#allocation3], 4
      %s24 = int_to_ptr.vmem [resolvable:$true] %s23
      %29 = dma.hbm_to_vmem [thread:$0]  %s0, 2048, %s24, [#allocation4], 128, 128, 8
    $region5: #{tpu_custom_call.1} parent=1 // pred_fallthru
      _
    // Predicated region
    $region6: #{tpu_custom_call.1} parent=1 // pred_check
      _
    $region7: #{tpu_custom_call.1} parent=1 // pred_check_branch
      %31 = sbr.rel (0) target = $region9
    $region8: #{tpu_custom_call.1} parent=1 // pred_region
      %s33 = ssub.s32 256, 256
      %34 = vsyncadd [#allocation7], %s33
      %s35 = sshll.u32 [#allocation6], 4
      %s36 = int_to_ptr.vmem [resolvable:$true] %s35
      %41 = dma.hbm_to_vmem [thread:$0]  %s1, 256, %s36, [#allocation7], 64, 64, 4
    $region9: #{tpu_custom_call.1} parent=1 // pred_fallthru
      _
    // Predicated region
    $region10: #{tpu_custom_call.1} parent=1 // pred_check
      _
    $region11: #{tpu_custom_call.1} parent=1 // pred_check_branch
      %43 = sbr.rel (0) target = $region13
    $region12: #{tpu_custom_call.1} parent=1 // pred_region
      %s45 = ssub.s32 16, 16
      %46 = vsyncadd [#allocation7], %s45
      %s48 = sshll.u32 [#allocation8], 4
      %s49 = int_to_ptr.vmem [resolvable:$true] %s48
      %51 = dma.hbm_to_vmem [thread:$0]  %s2, 16, %s49, [#allocation7]
    $region13: #{tpu_custom_call.1} parent=1 // pred_fallthru
      _
    // Predicated region
    $region14: #{tpu_custom_call.1} parent=1 // pred_check
      _
    $region15: #{tpu_custom_call.1} parent=1 // pred_check_branch
      %53 = sbr.rel (0) target = $region17
    $region16: #{tpu_custom_call.1} parent=1 // pred_region
      %s55 = ssub.s32 256, 256
      %56 = vsyncadd [#allocation10], %s55
      %s57 = sshll.u32 [#allocation9], 4
      %s58 = int_to_ptr.vmem [resolvable:$true] %s57
      %63 = dma.hbm_to_vmem [thread:$0]  %s3, 256, %s58, [#allocation10], 64, 64, 4
    $region17: #{tpu_custom_call.1} parent=1 // pred_fallthru
      _
    // Predicated region
    $region18: #{tpu_custom_call.1} parent=1 // pred_check
      _
    $region19: #{tpu_custom_call.1} parent=1 // pred_check_branch
      %65 = sbr.rel (0) target = $region21
    $region20: #{tpu_custom_call.1} parent=1 // pred_region
      %s67 = ssub.s32 16, 16
      %68 = vsyncadd [#allocation10], %s67
      %s70 = sshll.u32 [#allocation11], 4
      %s71 = int_to_ptr.vmem [resolvable:$true] %s70
      %73 = dma.hbm_to_vmem [thread:$0]  %s4, 16, %s71, [#allocation10]
    $region21: #{tpu_custom_call.1} parent=1 // pred_fallthru
      _
    // Predicated region
    $region22: #{tpu_custom_call.1} parent=1 // pred_check
      _
    $region23: #{tpu_custom_call.1} parent=1 // pred_check_branch
      %75 = sbr.rel (0) target = $region25
    $region24: #{tpu_custom_call.1} parent=1 // pred_region
      %s77 = ssub.s32 16, 16
      %78 = vsyncadd [#allocation13], %s77
      %s80 = sshll.u32 [#allocation12], 4
      %s81 = int_to_ptr.vmem [resolvable:$true] %s80
      %83 = dma.hbm_to_vmem [thread:$0]  %s5, 16, %s81, [#allocation13]
    $region25: #{tpu_custom_call.1} parent=1 // pred_fallthru
      _
    // Predicated region
    $region26: #{tpu_custom_call.1} parent=1 // pred_check
      _
    $region27: #{tpu_custom_call.1} parent=1 // pred_check_branch
      %85 = sbr.rel (0) target = $region29
    $region28: #{tpu_custom_call.1} parent=1 // pred_region
      _
    $region29: #{tpu_custom_call.1} parent=1 // pred_fallthru
      _
    // Predicated region
    $region30: #{tpu_custom_call.1} parent=1 // pred_check
      _
    $region31: #{tpu_custom_call.1} parent=1 // pred_check_branch
      %87 = sbr.rel (0) target = $region33
    $region32: #{tpu_custom_call.1} parent=1 // pred_region
      %88 = dma.done [#allocation4], 2048
    $region33: #{tpu_custom_call.1} parent=1 // pred_fallthru
      _
    // Predicated region
    $region34: #{tpu_custom_call.1} parent=1 // pred_check
      _
    $region35: #{tpu_custom_call.1} parent=1 // pred_check_branch
      %90 = sbr.rel (0) target = $region37
    $region36: #{tpu_custom_call.1} parent=1 // pred_region
      %91 = dma.done [#allocation7], 256
    $region37: #{tpu_custom_call.1} parent=1 // pred_fallthru
      _
    // Predicated region
    $region38: #{tpu_custom_call.1} parent=1 // pred_check
      _
    $region39: #{tpu_custom_call.1} parent=1 // pred_check_branch
      %93 = sbr.rel (0) target = $region41
    $region40: #{tpu_custom_call.1} parent=1 // pred_region
      %94 = dma.done [#allocation7], 16
    $region41: #{tpu_custom_call.1} parent=1 // pred_fallthru
      _
    // Predicated region
    $region42: #{tpu_custom_call.1} parent=1 // pred_check
      _
    $region43: #{tpu_custom_call.1} parent=1 // pred_check_branch
      %96 = sbr.rel (0) target = $region45
    $region44: #{tpu_custom_call.1} parent=1 // pred_region
      %97 = dma.done [#allocation10], 256
    $region45: #{tpu_custom_call.1} parent=1 // pred_fallthru
      _
    // Predicated region
    $region46: #{tpu_custom_call.1} parent=1 // pred_check
      _
    $region47: #{tpu_custom_call.1} parent=1 // pred_check_branch
      %99 = sbr.rel (0) target = $region49
    $region48: #{tpu_custom_call.1} parent=1 // pred_region
      %100 = dma.done [#allocation10], 16
    $region49: #{tpu_custom_call.1} parent=1 // pred_fallthru
      _
    // Predicated region
    $region50: #{tpu_custom_call.1} parent=1 // pred_check
      _
    $region51: #{tpu_custom_call.1} parent=1 // pred_check_branch
      %102 = sbr.rel (0) target = $region53
    $region52: #{tpu_custom_call.1} parent=1 // pred_region
      %103 = dma.done [#allocation13], 16
    $region53: #{tpu_custom_call.1} parent=1 // pred_fallthru
      _
    %v105 = vld [vmem:[#allocation3] sm:$0xff]
    %v106 = vld [vmem:[#allocation3 + $0x8] sm:$0xff]
    %v107 = vld [vmem:[#allocation3 + $0x10] sm:$0xff]
    %v108 = vld [vmem:[#allocation3 + $0x18] sm:$0xff]
    %v109 = vld [vmem:[#allocation3 + $0x20] sm:$0xff]
    %v110 = vld [vmem:[#allocation3 + $0x28] sm:$0xff]
    %v111 = vld [vmem:[#allocation3 + $0x30] sm:$0xff]
    %v112 = vld [vmem:[#allocation3 + $0x38] sm:$0xff]
    %v113 = vld [vmem:[#allocation3 + $0x40] sm:$0xff]
    %v114 = vld [vmem:[#allocation3 + $0x48] sm:$0xff]
    %v115 = vld [vmem:[#allocation3 + $0x50] sm:$0xff]
    %v116 = vld [vmem:[#allocation3 + $0x58] sm:$0xff]
    %v117 = vld [vmem:[#allocation3 + $0x60] sm:$0xff]
    %v118 = vld [vmem:[#allocation3 + $0x68] sm:$0xff]
    %v119 = vld [vmem:[#allocation3 + $0x70] sm:$0xff]
    %v120 = vld [vmem:[#allocation3 + $0x78] sm:$0xff]
    %v121 = vpack.c.bf16 %v106, %v105
    %v122 = vpack.c.bf16 %v108, %v107
    %v123 = vpack.c.bf16 %v110, %v109
    %v124 = vpack.c.bf16 %v112, %v111
    %v125 = vpack.c.bf16 %v114, %v113
    %v126 = vpack.c.bf16 %v116, %v115
    %v127 = vpack.c.bf16 %v118, %v117
    %v128 = vpack.c.bf16 %v120, %v119
    %v129 = vld [vmem:[#allocation6] sm:$0xf]
    %v130 = vld [vmem:[#allocation6 + $0x4] sm:$0xf]
    %v131 = vld [vmem:[#allocation6 + $0x8] sm:$0xf]
    %v132 = vld [vmem:[#allocation6 + $0xc] sm:$0xf]
    %v133 = vld [vmem:[#allocation8] sm:$0x1]
    %v135 = vlaneseq
    %v136 = vshrl.u32 %v135, 7
    %v137 = vsub.s32 0, %v136
    %v138 = vrot.slane %v133, %v137
    %v144 = vunpack.c.l.b16 %v129
    %v145 = vunpack.c.l.b16 %v130
    %v146 = vunpack.c.l.b16 %v131
    %v147 = vunpack.c.l.b16 %v132
    %v148 = vpack.c.b16 %v145, %v144
    %v149 = vpack.c.b16 %v147, %v146
    %vm152 = vcmask 261120
    %v154 = vsel %vm152, %v121, 0
    %v157 = vsel %vm152, %v122, 0
    %v160 = vsel %vm152, %v123, 0
    %v163 = vsel %vm152, %v124, 0
    %v166 = vsel %vm152, %v125, 0
    %v169 = vsel %vm152, %v126, 0
    %v172 = vsel %vm152, %v127, 0
    %v175 = vsel %vm152, %v128, 0
    %177 = vmatprep.subr.bf16.mxu0 0
    %178 = vmatpush1.bf16.msra.mxu0 %v148
    %179 = vmatprep.subr.bf16.mxu0 0
    %180 = vmatpush1.bf16.msra.mxu0 %v149
    %181 = vmatprep.subr.bf16.mxu0 0
    %182 = vmatpush1.bf16.msra.mxu0 0
    %183 = vmatprep.subr.bf16.mxu0 0
    %184 = vmatpush1.bf16.msra.mxu0 0
    %185 = vmatprep.subr.bf16.mxu0 0
    %186 = vmatpush1.bf16.msra.mxu0 0
    %187 = vmatprep.subr.bf16.mxu0 0
    %188 = vmatpush1.bf16.msra.mxu0 0
    %189 = vmatprep.subr.bf16.mxu0 0
    %190 = vmatpush1.bf16.msra.mxu0 0
    %191 = vmatprep.subr.bf16.mxu0 0
    %192 = vmatpush1.bf16.msra.mxu0 0
    %193 = vmatprep.subr.bf16.mxu0 0
    %194 = vmatpush1.bf16.msra.mxu0 0
    %195 = vmatprep.subr.bf16.mxu0 0
    %196 = vmatpush1.bf16.msra.mxu0 0
    %197 = vmatprep.subr.bf16.mxu0 0
    %198 = vmatpush1.bf16.msra.mxu0 0
    %199 = vmatprep.subr.bf16.mxu0 0
    %200 = vmatpush1.bf16.msra.mxu0 0
    %201 = vmatprep.subr.bf16.mxu0 0
    %202 = vmatpush1.bf16.msra.mxu0 0
    %203 = vmatprep.subr.bf16.mxu0 0
    %204 = vmatpush1.bf16.msra.mxu0 0
    %205 = vmatprep.subr.bf16.mxu0 0
    %206 = vmatpush1.bf16.msra.mxu0 0
    %207 = vmatprep.subr.bf16.mxu0 0
    %208 = vmatpush1.bf16.msra.mxu0 0
    %209 = vmatprep.mubr.bf16.mxu0 0
    %210 = vmatmul.mubr.bf16.gmra.mrb[0].mxu0 %v154
    %v211 = vpop.f32.mrb[0].mxu0
    %v212 = vadd.f32 %v138, %v211
    %v213 = vpop.f32.mrb[0].mxu0
    %v214 = vpop.f32.mrb[0].mxu0
    %v215 = vadd.f32 %v138, %v214
    %v216 = vpop.f32.mrb[0].mxu0
    %217 = vmatprep.mubr.bf16.mxu0 0
    %218 = vmatmul.mubr.bf16.gmra.mrb[0].mxu0 %v157
    %v219 = vpop.f32.mrb[0].mxu0
    %v220 = vadd.f32 %v138, %v219
    %v221 = vpop.f32.mrb[0].mxu0
    %v222 = vpop.f32.mrb[0].mxu0
    %v223 = vadd.f32 %v138, %v222
    %v224 = vpop.f32.mrb[0].mxu0
    %225 = vmatprep.mubr.bf16.mxu0 0
    %226 = vmatmul.mubr.bf16.gmra.mrb[0].mxu0 %v160
    %v227 = vpop.f32.mrb[0].mxu0
    %v228 = vadd.f32 %v138, %v227
    %v229 = vpop.f32.mrb[0].mxu0
    %v230 = vpop.f32.mrb[0].mxu0
    %v231 = vadd.f32 %v138, %v230
    %v232 = vpop.f32.mrb[0].mxu0
    %233 = vmatprep.mubr.bf16.mxu0 0
    %234 = vmatmul.mubr.bf16.gmra.mrb[0].mxu0 %v163
    %v235 = vpop.f32.mrb[0].mxu0
    %v236 = vadd.f32 %v138, %v235
    %v237 = vpop.f32.mrb[0].mxu0
    %v238 = vpop.f32.mrb[0].mxu0
    %v239 = vadd.f32 %v138, %v238
    %v240 = vpop.f32.mrb[0].mxu0
    %241 = vmatprep.mubr.bf16.mxu0 0
    %242 = vmatmul.mubr.bf16.gmra.mrb[0].mxu0 %v166
    %v243 = vpop.f32.mrb[0].mxu0
    %v244 = vadd.f32 %v138, %v243
    %v245 = vpop.f32.mrb[0].mxu0
    %v246 = vpop.f32.mrb[0].mxu0
    %v247 = vadd.f32 %v138, %v246
    %v248 = vpop.f32.mrb[0].mxu0
    %249 = vmatprep.mubr.bf16.mxu0 0
    %250 = vmatmul.mubr.bf16.gmra.mrb[0].mxu0 %v169
    %v251 = vpop.f32.mrb[0].mxu0
    %v252 = vadd.f32 %v138, %v251
    %v253 = vpop.f32.mrb[0].mxu0
    %v254 = vpop.f32.mrb[0].mxu0
    %v255 = vadd.f32 %v138, %v254
    %v256 = vpop.f32.mrb[0].mxu0
    %257 = vmatprep.mubr.bf16.mxu0 0
    %258 = vmatmul.mubr.bf16.gmra.mrb[0].mxu0 %v172
    %v259 = vpop.f32.mrb[0].mxu0
    %v260 = vadd.f32 %v138, %v259
    %v261 = vpop.f32.mrb[0].mxu0
    %v262 = vpop.f32.mrb[0].mxu0
    %v263 = vadd.f32 %v138, %v262
    %v264 = vpop.f32.mrb[0].mxu0
    %265 = vmatprep.mubr.bf16.mxu0 0
    %266 = vmatmul.mubr.bf16.gmra.mrb[0].mxu0 %v175
    %v267 = vpop.f32.mrb[0].mxu0
    %v268 = vadd.f32 %v138, %v267
    %v269 = vpop.f32.mrb[0].mxu0
    %v270 = vpop.f32.mrb[0].mxu0
    %v271 = vadd.f32 %v138, %v270
    %v272 = vpop.f32.mrb[0].mxu0
    %273 = vdwg.mxu0
    %v274 = vmax.f32 %v212, 0.0
    %v275 = vmax.f32 %v215, 0.0
    %v276 = vmax.f32 %v220, 0.0
    %v277 = vmax.f32 %v223, 0.0
    %v278 = vmax.f32 %v228, 0.0
    %v279 = vmax.f32 %v231, 0.0
    %v280 = vmax.f32 %v236, 0.0
    %v281 = vmax.f32 %v239, 0.0
    %v282 = vmax.f32 %v244, 0.0
    %v283 = vmax.f32 %v247, 0.0
    %v284 = vmax.f32 %v252, 0.0
    %v285 = vmax.f32 %v255, 0.0
    %v286 = vmax.f32 %v260, 0.0
    %v287 = vmax.f32 %v263, 0.0
    %v288 = vmax.f32 %v268, 0.0
    %v289 = vmax.f32 %v271, 0.0
    %v290 = vpack.c.bf16 %v275, %v274
    %v291 = vpack.c.bf16 %v277, %v276
    %v292 = vpack.c.bf16 %v279, %v278
    %v293 = vpack.c.bf16 %v281, %v280
    %v294 = vpack.c.bf16 %v283, %v282
    %v295 = vpack.c.bf16 %v285, %v284
    %v296 = vpack.c.bf16 %v287, %v286
    %v297 = vpack.c.bf16 %v289, %v288
    %v298 = vld [vmem:[#allocation9] sm:$0xf]
    %v299 = vld [vmem:[#allocation9 + $0x4] sm:$0xf]
    %v300 = vld [vmem:[#allocation9 + $0x8] sm:$0xf]
    %v301 = vld [vmem:[#allocation9 + $0xc] sm:$0xf]
    %v302 = vld [vmem:[#allocation11] sm:$0x1]
    %v304 = vlaneseq
    %v305 = vshrl.u32 %v304, 7
    %v306 = vsub.s32 0, %v305
    %v307 = vrot.slane %v302, %v306
    %v313 = vunpack.c.l.b16 %v298
    %v314 = vunpack.c.l.b16 %v299
    %v315 = vunpack.c.l.b16 %v300
    %v316 = vunpack.c.l.b16 %v301
    %v317 = vpack.c.b16 %v314, %v313
    %v318 = vpack.c.b16 %v316, %v315
    %v322 = vsel %vm152, %v290, 0
    %v325 = vsel %vm152, %v291, 0
    %v328 = vsel %vm152, %v292, 0
    %v331 = vsel %vm152, %v293, 0
    %v334 = vsel %vm152, %v294, 0
    %v337 = vsel %vm152, %v295, 0
    %v340 = vsel %vm152, %v296, 0
    %v343 = vsel %vm152, %v297, 0
    %345 = vmatprep.subr.bf16.mxu0 0
    %346 = vmatpush1.bf16.msra.mxu0 %v317
    %347 = vmatprep.subr.bf16.mxu0 0
    %348 = vmatpush1.bf16.msra.mxu0 %v318
    %349 = vmatprep.subr.bf16.mxu0 0
    %350 = vmatpush1.bf16.msra.mxu0 0
    %351 = vmatprep.subr.bf16.mxu0 0
    %352 = vmatpush1.bf16.msra.mxu0 0
    %353 = vmatprep.subr.bf16.mxu0 0
    %354 = vmatpush1.bf16.msra.mxu0 0
    %355 = vmatprep.subr.bf16.mxu0 0
    %356 = vmatpush1.bf16.msra.mxu0 0
    %357 = vmatprep.subr.bf16.mxu0 0
    %358 = vmatpush1.bf16.msra.mxu0 0
    %359 = vmatprep.subr.bf16.mxu0 0
    %360 = vmatpush1.bf16.msra.mxu0 0
    %361 = vmatprep.subr.bf16.mxu0 0
    %362 = vmatpush1.bf16.msra.mxu0 0
    %363 = vmatprep.subr.bf16.mxu0 0
    %364 = vmatpush1.bf16.msra.mxu0 0
    %365 = vmatprep.subr.bf16.mxu0 0
    %366 = vmatpush1.bf16.msra.mxu0 0
    %367 = vmatprep.subr.bf16.mxu0 0
    %368 = vmatpush1.bf16.msra.mxu0 0
    %369 = vmatprep.subr.bf16.mxu0 0
    %370 = vmatpush1.bf16.msra.mxu0 0
    %371 = vmatprep.subr.bf16.mxu0 0
    %372 = vmatpush1.bf16.msra.mxu0 0
    %373 = vmatprep.subr.bf16.mxu0 0
    %374 = vmatpush1.bf16.msra.mxu0 0
    %375 = vmatprep.subr.bf16.mxu0 0
    %376 = vmatpush1.bf16.msra.mxu0 0
    %377 = vmatprep.mubr.bf16.mxu0 0
    %378 = vmatmul.mubr.bf16.gmra.mrb[0].mxu0 %v322
    %v379 = vpop.f32.mrb[0].mxu0
    %v380 = vadd.f32 %v307, %v379
    %v381 = vpop.f32.mrb[0].mxu0
    %v382 = vpop.f32.mrb[0].mxu0
    %v383 = vadd.f32 %v307, %v382
    %v384 = vpop.f32.mrb[0].mxu0
    %385 = vmatprep.mubr.bf16.mxu0 0
    %386 = vmatmul.mubr.bf16.gmra.mrb[0].mxu0 %v325
    %v387 = vpop.f32.mrb[0].mxu0
    %v388 = vadd.f32 %v307, %v387
    %v389 = vpop.f32.mrb[0].mxu0
    %v390 = vpop.f32.mrb[0].mxu0
    %v391 = vadd.f32 %v307, %v390
    %v392 = vpop.f32.mrb[0].mxu0
    %393 = vmatprep.mubr.bf16.mxu0 0
    %394 = vmatmul.mubr.bf16.gmra.mrb[0].mxu0 %v328
    %v395 = vpop.f32.mrb[0].mxu0
    %v396 = vadd.f32 %v307, %v395
    %v397 = vpop.f32.mrb[0].mxu0
    %v398 = vpop.f32.mrb[0].mxu0
    %v399 = vadd.f32 %v307, %v398
    %v400 = vpop.f32.mrb[0].mxu0
    %401 = vmatprep.mubr.bf16.mxu0 0
    %402 = vmatmul.mubr.bf16.gmra.mrb[0].mxu0 %v331
    %v403 = vpop.f32.mrb[0].mxu0
    %v404 = vadd.f32 %v307, %v403
    %v405 = vpop.f32.mrb[0].mxu0
    %v406 = vpop.f32.mrb[0].mxu0
    %v407 = vadd.f32 %v307, %v406
    %v408 = vpop.f32.mrb[0].mxu0
    %409 = vmatprep.mubr.bf16.mxu0 0
    %410 = vmatmul.mubr.bf16.gmra.mrb[0].mxu0 %v334
    %v411 = vpop.f32.mrb[0].mxu0
    %v412 = vadd.f32 %v307, %v411
    %v413 = vpop.f32.mrb[0].mxu0
    %v414 = vpop.f32.mrb[0].mxu0
    %v415 = vadd.f32 %v307, %v414
    %v416 = vpop.f32.mrb[0].mxu0
    %417 = vmatprep.mubr.bf16.mxu0 0
    %418 = vmatmul.mubr.bf16.gmra.mrb[0].mxu0 %v337
    %v419 = vpop.f32.mrb[0].mxu0
    %v420 = vadd.f32 %v307, %v419
    %v421 = vpop.f32.mrb[0].mxu0
    %v422 = vpop.f32.mrb[0].mxu0
    %v423 = vadd.f32 %v307, %v422
    %v424 = vpop.f32.mrb[0].mxu0
    %425 = vmatprep.mubr.bf16.mxu0 0
    %426 = vmatmul.mubr.bf16.gmra.mrb[0].mxu0 %v340
    %v427 = vpop.f32.mrb[0].mxu0
    %v428 = vadd.f32 %v307, %v427
    %v429 = vpop.f32.mrb[0].mxu0
    %v430 = vpop.f32.mrb[0].mxu0
    %v431 = vadd.f32 %v307, %v430
    %v432 = vpop.f32.mrb[0].mxu0
    %433 = vmatprep.mubr.bf16.mxu0 0
    %434 = vmatmul.mubr.bf16.gmra.mrb[0].mxu0 %v343
    %v435 = vpop.f32.mrb[0].mxu0
    %v436 = vadd.f32 %v307, %v435
    %v437 = vpop.f32.mrb[0].mxu0
    %v438 = vpop.f32.mrb[0].mxu0
    %v439 = vadd.f32 %v307, %v438
    %v440 = vpop.f32.mrb[0].mxu0
    %441 = vdwg.mxu0
    %v442 = vmax.f32 %v380, 0.0
    %v443 = vmax.f32 %v383, 0.0
    %v444 = vmax.f32 %v388, 0.0
    %v445 = vmax.f32 %v391, 0.0
    %v446 = vmax.f32 %v396, 0.0
    %v447 = vmax.f32 %v399, 0.0
    %v448 = vmax.f32 %v404, 0.0
    %v449 = vmax.f32 %v407, 0.0
    %v450 = vmax.f32 %v412, 0.0
    %v451 = vmax.f32 %v415, 0.0
    %v452 = vmax.f32 %v420, 0.0
    %v453 = vmax.f32 %v423, 0.0
    %v454 = vmax.f32 %v428, 0.0
    %v455 = vmax.f32 %v431, 0.0
    %v456 = vmax.f32 %v436, 0.0
    %v457 = vmax.f32 %v439, 0.0
    %v458 = vld [vmem:[#allocation12] sm:$0x1]
    %v459 = vpack.c.bf16 %v443, %v442
    %v460 = vpack.c.bf16 %v445, %v444
    %v461 = vpack.c.bf16 %v447, %v446
    %v462 = vpack.c.bf16 %v449, %v448
    %v463 = vpack.c.bf16 %v451, %v450
    %v464 = vpack.c.bf16 %v453, %v452
    %v465 = vpack.c.bf16 %v455, %v454
    %v466 = vpack.c.bf16 %v457, %v456
    %s467 = sld [smem:[#allocation2]]
    %v468 = vstv %s467
    %v470 = vsel %vm152, %v458, 0
    %v473 = vsel %vm152, %v459, 0
    %v476 = vsel %vm152, %v460, 0
    %v479 = vsel %vm152, %v461, 0
    %v482 = vsel %vm152, %v462, 0
    %v485 = vsel %vm152, %v463, 0
    %v488 = vsel %vm152, %v464, 0
    %v491 = vsel %vm152, %v465, 0
    %v494 = vsel %vm152, %v466, 0
    %496 = vmatprep.subr.bf16.mxu0 0
    %497 = vmatpush1.bf16.xpose.msra.mxu0 %v473
    %498 = vmatprep.subr.bf16.mxu0 0
    %499 = vmatpush1.bf16.xpose.msra.mxu0 %v476
    %500 = vmatprep.subr.bf16.mxu0 0
    %501 = vmatpush1.bf16.xpose.msra.mxu0 %v479
    %502 = vmatprep.subr.bf16.mxu0 0
    %503 = vmatpush1.bf16.xpose.msra.mxu0 %v482
    %504 = vmatprep.subr.bf16.mxu0 0
    %505 = vmatpush1.bf16.xpose.msra.mxu0 %v485
    %506 = vmatprep.subr.bf16.mxu0 0
    %507 = vmatpush1.bf16.xpose.msra.mxu0 %v488
    %508 = vmatprep.subr.bf16.mxu0 0
    %509 = vmatpush1.bf16.xpose.msra.mxu0 %v491
    %510 = vmatprep.subr.bf16.mxu0 0
    %511 = vmatpush1.bf16.xpose.msra.mxu0 %v494
    %512 = vmatprep.subr.bf16.mxu0 0
    %513 = vmatpush1.bf16.xpose.msra.mxu0 0
    %514 = vmatprep.subr.bf16.mxu0 0
    %515 = vmatpush1.bf16.xpose.msra.mxu0 0
    %516 = vmatprep.subr.bf16.mxu0 0
    %517 = vmatpush1.bf16.xpose.msra.mxu0 0
    %518 = vmatprep.subr.bf16.mxu0 0
    %519 = vmatpush1.bf16.xpose.msra.mxu0 0
    %520 = vmatprep.subr.bf16.mxu0 0
    %521 = vmatpush1.bf16.xpose.msra.mxu0 0
    %522 = vmatprep.subr.bf16.mxu0 0
    %523 = vmatpush1.bf16.xpose.msra.mxu0 0
    %524 = vmatprep.subr.bf16.mxu0 0
    %525 = vmatpush1.bf16.xpose.msra.mxu0 0
    %526 = vmatprep.subr.bf16.mxu0 0
    %527 = vmatpush1.bf16.xpose.msra.mxu0 0
    %528 = vmatprep.mubr.bf16.mxu0 0
    %529 = vmatmul.mubr.bf16.gmra.mrb[0].mxu0 %v470
    %v530 = vpop.f32.mrb[0].mxu0
    %v531 = vadd.f32 %v468, %v530
    %v532 = vpop.f32.mrb[0].mxu0
    %v533 = vpop.f32.mrb[0].mxu0
    %v534 = vpop.f32.mrb[0].mxu0
    %535 = vdwg.mxu0
    %536 = vst [vmem:[#allocation14] sm:$0x1] %v531
    // Predicated region
    $region54: #{tpu_custom_call.1} parent=1 // pred_check
      _
    $region55: #{tpu_custom_call.1} parent=1 // pred_check_branch
      %538 = sbr.rel (0) target = $region57
    $region56: #{tpu_custom_call.1} parent=1 // pred_region
      %s540 = ssub.s32 16, 16
      %541 = vsyncadd [#allocation5], %s540
      %s543 = sshll.u32 [#allocation14], 4
      %s544 = int_to_ptr.vmem [resolvable:$true] %s543
      %546 = dma.vmem_to_hbm [thread:$0]  %s544, 16, %s7, [#allocation5]
    $region57: #{tpu_custom_call.1} parent=1 // pred_fallthru
      _
    // Predicated region
    $region58: #{tpu_custom_call.1} parent=1 // pred_check
      _
    $region59: #{tpu_custom_call.1} parent=1 // pred_check_branch
      %548 = sbr.rel (0) target = $region61
    $region60: #{tpu_custom_call.1} parent=1 // pred_region
      %549 = dma.done [#allocation5], 16
    $region61: #{tpu_custom_call.1} parent=1 // pred_fallthru
      _
    %550 = vsyncpa [#allocation4], 1
    %551 = vsyncpa [#allocation7], 1
    %552 = vsyncpa [#allocation10], 1
    %553 = vsyncpa [#allocation13], 1
    %554 = vsyncpa [#allocation5], 1

</llo_original>
